<compile_context>
chip_gen: v5e
topology: v5e:2x2
jax: 0.10.0
libtpu: 0.0.40
codegen_flags: <defaults>
</compile_context>

<pallas_src>
import functools

import jax
import jax.numpy as jnp
from jax import lax
from jax.experimental import pallas as pl
from jax.experimental.pallas import tpu as pltpu

_EPS = 1e-6
_LANES = 128
_ACC_ROWS = 256          # (256, 128) f32 accumulator scratch = 128 KiB


def _device_kind() -> str:
    try:
        return jax.devices()[0].device_kind.lower()
    except Exception:
        return ""


def _num_splits_for_device() -> int:
    # 2 partial sums on a leading "parallel" axis only where there are two
    # TensorCores per chip (v7x); on single-TC chips (v5e/v6e) the split only
    # costs (dummy clamped block, extra init/finalize boundary).
    kind = _device_kind()
    return 2 if ("v7" in kind or "7x" in kind) else 1


def _target_block_bytes() -> int:
    # Per-input block bytes.  2 inputs x 2 pipeline buffers + 128 KiB acc:
    #   v5e/unknown (16 MiB default scoped VMEM): 2 MiB blocks -> ~8.1 MiB
    #   v6e/v7x     (32 MiB default scoped VMEM): 4 MiB blocks -> ~16.1 MiB
    kind = _device_kind()
    if "v6" in kind or "v7" in kind or "7x" in kind:
        return 4 * 1024 * 1024
    return 2 * 1024 * 1024


def _rmse_partial_kernel(yhat_ref, y_ref, out_ref, acc_ref, *,
                         num_blocks, blocks_per_split, block_rows, acc_rows,
                         last_block_rows, needs_mask):
    """Accumulate sum((yhat - y)^2) for one split; emit a (1, 128) partial."""
    c = pl.program_id(0)               # split index ("parallel")
    k = pl.program_id(1)               # block-within-split (reduction)
    blk = c * blocks_per_split + k     # global row-block index
    num_folds = block_rows // acc_rows

    @pl.when(k == 0)
    def _():
        acc_ref[...] = jnp.zeros_like(acc_ref)

    def chunk_sq(r0):
        d = (yhat_ref[pl.ds(r0, acc_rows), :].astype(jnp.float32)
             - y_ref[pl.ds(r0, acc_rows), :].astype(jnp.float32))
        return d * d

    def run_folds(fold_fn):
        if num_folds == 1:
            fold_fn(0)                                   # static offset
        else:
            def body(f, carry):
                fold_fn(pl.multiple_of(f * acc_rows, acc_rows))
                return carry
            lax.fori_loop(0, num_folds, body, 0)

    def fast_fold(r0):
        acc_ref[...] += chunk_sq(r0)                      # pure VPU, no mask

    if needs_mask:
        # Interior blocks: unmasked fast path.
        @pl.when(blk < num_blocks - 1)
        def _():
            run_folds(fast_fold)

        # Last (possibly ragged) block and dummy split blocks: row mask.
        #   last real block  -> limit = last_block_rows
        #   dummy blocks     -> limit = 0 (index_map clamps their DMA)
        @pl.when(blk >= num_blocks - 1)
        def _():
            limit = jnp.where(blk == num_blocks - 1,
                              jnp.int32(last_block_rows), jnp.int32(0))
            row = lax.broadcasted_iota(jnp.int32, (acc_rows, _LANES), 0)

            def masked_fold(r0):
                sq = chunk_sq(r0)
                acc_ref[...] += jnp.where(row < (limit - r0), sq, 0.0)

            run_folds(masked_fold)
    else:
        run_folds(fast_fold)

    @pl.when(k == pl.num_programs(1) - 1)
    def _():
        # One small cross-sublane reduce per split; lane-dense (1, 128) store.
        out_ref[...] = jnp.sum(acc_ref[...], axis=0, keepdims=True)


def rmse_loss(yhat: jax.Array, y: jax.Array, eps: float = _EPS) -> jax.Array:
    assert yhat.shape == y.shape, "yhat and y must have the same shape"
    n_elems = yhat.size

    flat_yhat = yhat.reshape(-1)       # free for contiguous arrays; no astype
    flat_y = y.reshape(-1)

    # Lane alignment: only hit when numel isn't a multiple of 128; pads with
    # zeros (which add nothing to the squared-diff sum).
    # TODO(synk): for huge non-128-multiple inputs this pad materializes a
    # copy; a fully in-kernel 1-D tail mask would avoid it.
    rem = n_elems % _LANES
    if rem:
        pad = _LANES - rem
        flat_yhat = jnp.pad(flat_yhat, (0, pad))
        flat_y = jnp.pad(flat_y, (0, pad))

    rows = flat_yhat.size // _LANES
    slab_yhat = flat_yhat.reshape(rows, _LANES)
    slab_y = flat_y.reshape(rows, _LANES)

    # --- generation-aware tiling (sized by bytes, not rows) ----------------
    itemsize = max(jnp.dtype(yhat.dtype).itemsize, jnp.dtype(y.dtype).itemsize)
    max_block_rows = max(
        _ACC_ROWS,
        (_target_block_bytes() // (itemsize * _LANES)) // _ACC_ROWS * _ACC_ROWS)

    if rows <= _ACC_ROWS:
        acc_rows = rows                # tiny input: single fold, no padding
        block_rows = rows
    else:
        acc_rows = _ACC_ROWS
        block_rows = min(max_block_rows, (rows // _ACC_ROWS) * _ACC_ROWS)

    num_blocks = pl.cdiv(rows, block_rows)
    num_splits = _num_splits_for_device() if num_blocks >= 2 else 1
    blocks_per_split = pl.cdiv(num_blocks, num_splits)
    last_block_rows = rows - (num_blocks - 1) * block_rows
    needs_mask = (num_splits * blocks_per_split != num_blocks) or (
        last_block_rows != block_rows)

    def in_index_map(c, k):
        # Clamp so dummy steps (from the split) re-read a valid block; their
        # contribution is zeroed in-kernel, so no double counting.
        return (jnp.minimum(c * blocks_per_split + k, num_blocks - 1), 0)

    kernel = functools.partial(
        _rmse_partial_kernel,
        num_blocks=num_blocks,
        blocks_per_split=blocks_per_split,
        block_rows=block_rows,
        acc_rows=acc_rows,
        last_block_rows=last_block_rows,
        needs_mask=needs_mask,
    )

    in_bytes = n_elems * (jnp.dtype(yhat.dtype).itemsize
                          + jnp.dtype(y.dtype).itemsize)
    cost = pl.CostEstimate(
        flops=3 * n_elems,
        transcendentals=0,             # sqrt happens in the wrapper epilogue
        bytes_accessed=in_bytes + 4 * num_splits * _LANES,
    )

    partials = pl.pallas_call(
        kernel,
        out_shape=jax.ShapeDtypeStruct((1, num_splits * _LANES), jnp.float32),
        grid_spec=pltpu.PrefetchScalarGridSpec(
            num_scalar_prefetch=0,
            grid=(num_splits, blocks_per_split),
            in_specs=[
                pl.BlockSpec((block_rows, _LANES), in_index_map),
                pl.BlockSpec((block_rows, _LANES), in_index_map),
            ],
            out_specs=pl.BlockSpec((1, _LANES), lambda c, k: (0, c)),
            scratch_shapes=[pltpu.VMEM((acc_rows, _LANES), jnp.float32)],
        ),
        compiler_params=pltpu.CompilerParams(
            dimension_semantics=("parallel", "arbitrary"),
        ),
        cost_estimate=cost,
    )(slab_yhat, slab_y)

    # Tiny scalar epilogue: combine partials, divide by the TRUE element
    # count, add eps inside the sqrt (matches torch.sqrt(MSELoss(...) + eps)).
    mse = jnp.sum(partials) / jnp.float32(n_elems)
    return jnp.sqrt(mse + jnp.float32(eps))


def _reference(yhat, y, eps=_EPS):
    return jnp.sqrt(jnp.mean((yhat.astype(jnp.float32)
                              - y.astype(jnp.float32)) ** 2) + eps)


if __name__ == "__main__":
    key = jax.random.PRNGKey(0)
    k1, k2, k3, k4, k5, k6, k7, k8 = jax.random.split(key, 8)

    # Primary small test, NCHW-ish regression target.
    x_shape = (2, 4, 16, 16)
    yhat = jax.random.normal(k1, x_shape, dtype=jnp.float32)
    y = jax.random.normal(k2, x_shape, dtype=jnp.float32)
    loss = jax.block_until_ready(rmse_loss(yhat, y))
    ref = _reference(yhat, y)
    assert jnp.allclose(loss, ref, rtol=1e-5, atol=1e-6), (loss, ref)

    # Ragged element count (exercises the <=127-element lane pad path).
    yhat_r = jax.random.normal(k3, (3, 5, 7, 11), dtype=jnp.float32)
    y_r = jax.random.normal(k4, (3, 5, 7, 11), dtype=jnp.float32)
    loss_r = jax.block_until_ready(rmse_loss(yhat_r, y_r))
    ref_r = _reference(yhat_r, y_r)
    assert jnp.allclose(loss_r, ref_r, rtol=1e-5, atol=1e-6), (loss_r, ref_r)

    # Multi-block path: interior fast path + masked ragged tail block
    # (rows = 9216 > block_rows on every generation); also exercises the
    # split/dummy-block logic if running on a 2-TensorCore chip.
    yhat_b = jax.random.normal(k5, (72, 128, 128), dtype=jnp.float32)
    y_b = jax.random.normal(k6, (72, 128, 128), dtype=jnp.float32)
    loss_b = jax.block_until_ready(rmse_loss(yhat_b, y_b))
    ref_b = _reference(yhat_b, y_b)
    assert jnp.allclose(loss_b, ref_b, rtol=1e-5, atol=1e-6), (loss_b, ref_b)

    # bf16 inputs: kernel casts per block (half the HBM bytes moved),
    # byte-sized tiling doubles block_rows.
    yhat_h = jax.random.normal(k7, (8, 256, 128), dtype=jnp.bfloat16)
    y_h = jax.random.normal(k8, (8, 256, 128), dtype=jnp.bfloat16)
    loss_h = jax.block_until_ready(rmse_loss(yhat_h, y_h))
    ref_h = _reference(yhat_h, y_h)
    assert jnp.allclose(loss_h, ref_h, rtol=1e-4, atol=1e-5), (loss_h, ref_h)

    print("KERNEL_OK")
</pallas_src>

<mosaic_0001>
module attributes {stable_mosaic.version = 11 : i64} {
  func.func @_rmse_partial_kernel(%arg0: i32, %arg1: i32, %arg2: memref<16x128xf32, #tpu.memory_space<vmem>>, %arg3: memref<16x128xf32, #tpu.memory_space<vmem>>, %arg4: memref<1x128xf32, #tpu.memory_space<vmem>>, %arg5: memref<16x128xf32, #tpu.memory_space<vmem>>) attributes {dimension_semantics = [#tpu.dimension_semantics<parallel>, #tpu.dimension_semantics<arbitrary>], iteration_bounds = array<i64: 1, 1>, scalar_prefetch = 0 : i64, scratch_operands = 1 : i64, tpu.core_type = #tpu.core_type<tc>, window_params = [{transform_indices = @transform_0, window_bounds = array<i64: 16, 128>}, {transform_indices = @transform_1, window_bounds = array<i64: 16, 128>}, {transform_indices = @transform_2, window_bounds = array<i64: 1, 128>}]} {
    %c0_i32 = arith.constant 0 : i32
    %0 = arith.cmpi eq, %arg1, %c0_i32 : i32
    %1 = arith.extui %0 : i1 to i32
    %c0_i32_0 = arith.constant 0 : i32
    %2 = arith.cmpi ne, %1, %c0_i32_0 : i32
    scf.if %2 {
      %cst = arith.constant 0.000000e+00 : f32
      %13 = vector.broadcast %cst : f32 to vector<16x128xf32>
      %c0_10 = arith.constant 0 : index
      %c0_11 = arith.constant 0 : index
      %14 = vector.load %arg5[%c0_10, %c0_11] : memref<16x128xf32, #tpu.memory_space<vmem>>, vector<16x128xf32>
      tpu.vector_store %arg5[%c0_10, %c0_11], %13 {strides = array<i32>} : memref<16x128xf32, #tpu.memory_space<vmem>>, vector<16x128xf32>,
    } else {
    }
    %c0 = arith.constant 0 : index
    %c0_1 = arith.constant 0 : index
    %3 = vector.load %arg5[%c0, %c0_1] : memref<16x128xf32, #tpu.memory_space<vmem>>, vector<16x128xf32>
    %c0_2 = arith.constant 0 : index
    %c0_3 = arith.constant 0 : index
    %4 = vector.load %arg2[%c0_2, %c0_3] : memref<16x128xf32, #tpu.memory_space<vmem>>, vector<16x128xf32>
    %c0_4 = arith.constant 0 : index
    %c0_5 = arith.constant 0 : index
    %5 = vector.load %arg3[%c0_4, %c0_5] : memref<16x128xf32, #tpu.memory_space<vmem>>, vector<16x128xf32>
    %6 = arith.subf %4, %5 : vector<16x128xf32>
    %7 = arith.mulf %6, %6 : vector<16x128xf32>
    %8 = arith.addf %3, %7 : vector<16x128xf32>
    %c0_6 = arith.constant 0 : index
    %c0_7 = arith.constant 0 : index
    %9 = vector.load %arg5[%c0_6, %c0_7] : memref<16x128xf32, #tpu.memory_space<vmem>>, vector<16x128xf32>
    tpu.vector_store %arg5[%c0_6, %c0_7], %8 {strides = array<i32>} : memref<16x128xf32, #tpu.memory_space<vmem>>, vector<16x128xf32>,
    %c0_i32_8 = arith.constant 0 : i32
    %10 = arith.cmpi eq, %arg1, %c0_i32_8 : i32
    %11 = arith.extui %10 : i1 to i32
    %c0_i32_9 = arith.constant 0 : i32
    %12 = arith.cmpi ne, %11, %c0_i32_9 : i32
    scf.if %12 {
      %c0_10 = arith.constant 0 : index
      %c0_11 = arith.constant 0 : index
      %13 = vector.load %arg5[%c0_10, %c0_11] : memref<16x128xf32, #tpu.memory_space<vmem>>, vector<16x128xf32>
      %cst = arith.constant dense<0.000000e+00> : vector<128xf32>
      %14 = vector.multi_reduction <add>, %13, %cst [0] : vector<16x128xf32> to vector<128xf32>
      %15 = vector.shape_cast %14 : vector<128xf32> to vector<1x128xf32>
      %c0_12 = arith.constant 0 : index
      %c0_13 = arith.constant 0 : index
      %16 = vector.load %arg4[%c0_12, %c0_13] : memref<1x128xf32, #tpu.memory_space<vmem>>, vector<1x128xf32>
      tpu.vector_store %arg4[%c0_12, %c0_13], %15 {strides = array<i32>} : memref<1x128xf32, #tpu.memory_space<vmem>>, vector<1x128xf32>,
    } else {
    }
    return
  }
  func.func @transform_0(%arg0: i32, %arg1: i32) -> (i32, i32) {
    %c1_i32 = arith.constant 1 : i32
    %0 = arith.muli %arg0, %c1_i32 : i32
    %1 = arith.addi %0, %arg1 : i32
    %c0_i32 = arith.constant 0 : i32
    %2 = arith.minsi %1, %c0_i32 : i32
    %c0_i32_0 = arith.constant 0 : i32
    %c0_i32_1 = arith.constant 0 : i32
    return %2, %c0_i32_0 : i32, i32
  }
  func.func @transform_1(%arg0: i32, %arg1: i32) -> (i32, i32) {
    %c1_i32 = arith.constant 1 : i32
    %0 = arith.muli %arg0, %c1_i32 : i32
    %1 = arith.addi %0, %arg1 : i32
    %c0_i32 = arith.constant 0 : i32
    %2 = arith.minsi %1, %c0_i32 : i32
    %c0_i32_0 = arith.constant 0 : i32
    %c0_i32_1 = arith.constant 0 : i32
    return %2, %c0_i32_0 : i32, i32
  }
  func.func @transform_2(%arg0: i32, %arg1: i32) -> (i32, i32) {
    %c0_i32 = arith.constant 0 : i32
    %c0_i32_0 = arith.constant 0 : i32
    return %c0_i32, %arg0 : i32, i32
  }
}

</mosaic_0001>

<llo_original>
// kernel: tpu_custom_call.1
$region0: #{tpu_custom_call.1}
  #allocation0 [shape = 'u32[]', space=smem, size = 0x4, offset = 0x4, fixed_abs, tag = 'smem constant byte address 0x4 - core index']
  #allocation1 [shape = 'u32[72,128]{1,0:T(1,128)}', space=vmem, size = 0x9000, scoped, tag = 'internal scratch']
  #allocation2 [shape = 'f32[16,128]{1,0:T(8,128)}', space=vmem, size = 0x2000, scoped, tag = 'scratch operand']
  %s0 = inlined_call_operand.hbm [shape: f32[16,128], index: 0, kind: input, shape index: {}]
  %s1 = inlined_call_operand.hbm [shape: f32[16,128], index: 1, kind: input, shape index: {}]
  %s2 = inlined_call_operand.hbm [shape: f32[1,128], index: 2, kind: output, shape index: {}]
  %s3 = sld [smem:[#allocation0]]
  $region34: #{tpu_custom_call.1} parent=0
    _
  %s5 = ssub.s32 1, %s3
  %s6 = scalar_select 0, %s5, %s3
  $region1: #{tpu_custom_call.1} parent=0
    #allocation3 [shape = 'u8[8192]{0}', space=vmem, size = 0x2000, scoped, tag = 'input window, operand 0, single buffered']
    #allocation4 [shape = 's32[1]{0}', space=sflag, size = 0x4, scoped, tag = 'scoped memory for tpu_custom_call.1']
    #allocation5 [shape = 's32[1]{0}', space=sflag, size = 0x4, scoped, tag = 'scoped memory for tpu_custom_call.1']
    #allocation6 [shape = 'u8[8192]{0}', space=vmem, size = 0x2000, scoped, tag = 'input window, operand 1, single buffered']
    #allocation7 [shape = 's32[1]{0}', space=sflag, size = 0x4, scoped, tag = 'scoped memory for tpu_custom_call.1']
    #allocation8 [shape = 'u8[512]{0}', space=vmem, size = 0x400, scoped, tag = 'output window, operand 0, single buffered']
    %7 = vsyncpa [#allocation4], 0
    %8 = vsyncpa [#allocation7], 0
    %9 = vsyncpa [#allocation5], 0
    // Predicated region
    $region2: #{tpu_custom_call.1} parent=1 // pred_check
      _
    $region3: #{tpu_custom_call.1} parent=1 // pred_check_branch
      %11 = sbr.rel (0) target = $region5
    $region4: #{tpu_custom_call.1} parent=1 // pred_region
      %s12 = sadd.s32 0, 0
      %p13 = scmp.lt.s32.totalorder %s12, 0
      %s14 = scalar_select %p13, %s12, 0
      %s15 = smul.u32 2, %s14
      %17 = vsyncadd [#allocation4], 0
      %s18 = smul.addr %s15, 8
      %s19 = scalar_lea.hbm %s0, %s18
      %s20 = sshll.u32 %s19, 4
      %s21 = int_to_ptr.hbm [resolvable:$true] %s20
      %s22 = sshll.u32 [#allocation3], 4
      %s23 = int_to_ptr.vmem [resolvable:$true] %s22
      %28 = dma.hbm_to_vmem [thread:$0]  %s21, 256, %s23, [#allocation4], 128, 128, 8
    $region5: #{tpu_custom_call.1} parent=1 // pred_fallthru
      _
    // Predicated region
    $region6: #{tpu_custom_call.1} parent=1 // pred_check
      _
    $region7: #{tpu_custom_call.1} parent=1 // pred_check_branch
      %30 = sbr.rel (0) target = $region9
    $region8: #{tpu_custom_call.1} parent=1 // pred_region
      %s31 = sadd.s32 0, 0
      %p32 = scmp.lt.s32.totalorder %s31, 0
      %s33 = scalar_select %p32, %s31, 0
      %s34 = smul.u32 2, %s33
      %36 = vsyncadd [#allocation7], 0
      %s37 = smul.addr %s34, 8
      %s38 = scalar_lea.hbm %s1, %s37
      %s39 = sshll.u32 %s38, 4
      %s40 = int_to_ptr.hbm [resolvable:$true] %s39
      %s41 = sshll.u32 [#allocation6], 4
      %s42 = int_to_ptr.vmem [resolvable:$true] %s41
      %47 = dma.hbm_to_vmem [thread:$0]  %s40, 256, %s42, [#allocation7], 128, 128, 8
    $region9: #{tpu_custom_call.1} parent=1 // pred_fallthru
      _
    // Predicated region
    $region10: #{tpu_custom_call.1} parent=1 // pred_check
      _
    $region11: #{tpu_custom_call.1} parent=1 // pred_check_branch
      %49 = sbr.rel (0) target = $region13
    $region12: #{tpu_custom_call.1} parent=1 // pred_region
      %51 = dma.done [#allocation4], 256
    $region13: #{tpu_custom_call.1} parent=1 // pred_fallthru
      _
    // Predicated region
    $region14: #{tpu_custom_call.1} parent=1 // pred_check
      _
    $region15: #{tpu_custom_call.1} parent=1 // pred_check_branch
      %53 = sbr.rel (0) target = $region17
    $region16: #{tpu_custom_call.1} parent=1 // pred_region
      %55 = dma.done [#allocation7], 256
    $region17: #{tpu_custom_call.1} parent=1 // pred_fallthru
      _
    %s56 = sadd.s32 0, 0
    %p57 = scmp.lt.s32.totalorder %s56, 0
    %s58 = scalar_select %p57, %s56, 0
    %s59 = smul.u32 2, %s58
    %s60 = sadd.s32 0, 0
    %p61 = scmp.lt.s32.totalorder %s60, 0
    %s62 = scalar_select %p61, %s60, 0
    %s63 = smul.u32 2, %s62
    %p64 = scmp.eq.s32.totalorder 0, 0
    // Predicated region
    $region18: #{tpu_custom_call.1} parent=1 // pred_check
      %p65 = pneg %p64
    $region19: #{tpu_custom_call.1} parent=1 // pred_check_branch
      %67 = sbr.rel (%p65) target = $region21
    $region20: #{tpu_custom_call.1} parent=1 // pred_region
      %68 = vst [vmem:[#allocation2] sm:$0xff] 0.0
      %69 = vst [vmem:[#allocation2 + $0x8] sm:$0xff] 0.0
    $region21: #{tpu_custom_call.1} parent=1 // pred_fallthru
      _
    %v70 = vld [vmem:[#allocation2] sm:$0xff]
    %v71 = vld [vmem:[#allocation2 + $0x8] sm:$0xff]
    %v72 = vld [vmem:[#allocation3] sm:$0xff]
    %v73 = vld [vmem:[#allocation3 + $0x8] sm:$0xff]
    %v74 = vld [vmem:[#allocation6] sm:$0xff]
    %v75 = vld [vmem:[#allocation6 + $0x8] sm:$0xff]
    %v76 = vsub.f32 %v72, %v74
    %v77 = vsub.f32 %v73, %v75
    %v78 = vmul.f32 %v76, %v76
    %v79 = vmul.f32 %v77, %v77
    %v80 = vadd.f32 %v70, %v78
    %v81 = vadd.f32 %v71, %v79
    %82 = vst [vmem:[#allocation2] sm:$0xff] %v80
    %83 = vst [vmem:[#allocation2 + $0x8] sm:$0xff] %v81
    // Predicated region
    $region22: #{tpu_custom_call.1} parent=1 // pred_check
      %p84 = pneg %p64
    $region23: #{tpu_custom_call.1} parent=1 // pred_check_branch
      %86 = sbr.rel (%p84) target = $region25
    $region24: #{tpu_custom_call.1} parent=1 // pred_region
      %v87 = vld [vmem:[#allocation2] sm:$0xff]
      %v88 = vld [vmem:[#allocation2 + $0x8] sm:$0xff]
      %v89 = vadd.f32 %v87, %v88
      %v90 = vrot.slane %v89, 4
      %v91 = vadd.f32 %v89, %v90
      %v92 = vrot.slane %v91, 2
      %v93 = vadd.f32 %v91, %v92
      %v94 = vrot.slane %v93, 1
      %v95 = vadd.f32 %v93, %v94
      %96 = vst [vmem:[#allocation8] sm:$0x1] %v95
    $region25: #{tpu_custom_call.1} parent=1 // pred_fallthru
      _
    // Predicated region
    $region26: #{tpu_custom_call.1} parent=1 // pred_check
      _
    $region27: #{tpu_custom_call.1} parent=1 // pred_check_branch
      %98 = sbr.rel (0) target = $region29
    $region28: #{tpu_custom_call.1} parent=1 // pred_region
      %100 = vsyncadd [#allocation5], 0
      %s102 = sshll.u32 [#allocation8], 4
      %s103 = int_to_ptr.vmem [resolvable:$true] %s102
      %s104 = sshll.u32 %s2, 4
      %s105 = int_to_ptr.hbm [resolvable:$true] %s104
      %107 = dma.vmem_to_hbm [thread:$0]  %s103, 16, %s105, [#allocation5]
    $region29: #{tpu_custom_call.1} parent=1 // pred_fallthru
      _
    // Predicated region
    $region30: #{tpu_custom_call.1} parent=1 // pred_check
      _
    $region31: #{tpu_custom_call.1} parent=1 // pred_check_branch
      %109 = sbr.rel (0) target = $region33
    $region32: #{tpu_custom_call.1} parent=1 // pred_region
      %111 = dma.done [#allocation5], 16
    $region33: #{tpu_custom_call.1} parent=1 // pred_fallthru
      _
    %112 = vsyncpa [#allocation4], 1
    %113 = vsyncpa [#allocation7], 1
    %114 = vsyncpa [#allocation5], 1

</llo_original>
